<compile_context>
chip_gen: v7x
topology: tpu7x:2x2x1
jax: 0.10.0
libtpu: 0.0.40
codegen_flags: <defaults>
</compile_context>

<pallas_src>
import jax
import jax.numpy as jnp
from jax.experimental import pallas as pl
from jax.experimental.pallas import tpu as pltpu


# ---------------------------------------------------------------- kernel ----

def _pos_emb_kernel(x_ref, pos_ref, o_ref):
    # x_ref: (Bblk, Mblk)   pos_ref: (1, Mblk)  -- broadcasts over batch rows.
    o_ref[...] = x_ref[...] + pos_ref[...]


# --------------------------------------------------------------- tiling -----

_TARGET_TILE_BYTES = 2 * 1024 * 1024   # ~2 MiB input tile: >85% of HBM roofline
_VMEM_HARD_CAP = 48 * 1024 * 1024      # stay well under v7x 64 MiB physical VMEM
_MIN_PALLAS_BYTES = 256 * 1024         # below this, plain jnp add is faster


def _pick_blocks(B, M, itemsize):
    """Choose (Bblk, Mblk) for the flattened (B, M=N*D) view.

    Mblk: multiple of 128 (lane-dense) dividing M, as large as fits ~target.
    Bblk: divisor of B, multiple of the dtype's sublane packing (or full B).
    Double-buffered footprint (2x in + 2x out + 2x pos tile) kept < hard cap.
    """
    sub = max(1, (8 * 4) // itemsize)            # 8 f32, 16 bf16, 32 int8/fp8
    lane = 128

    # Batch-block candidates that keep the (8,128) layout rule happy.
    b_cands = sorted({d for d in range(1, B + 1)
                      if B % d == 0 and (d % sub == 0 or d == B)})
    b_min = b_cands[0]

    # Lane-dense candidates for the flattened seq*feature axis.
    m_cands = sorted({d for d in range(lane, M + 1, lane) if M % d == 0} | {M})

    def fits_cap(bblk, mblk):
        return (4 * bblk * mblk + 2 * mblk) * itemsize <= _VMEM_HARD_CAP

    # Largest Mblk such that even the smallest batch block stays near target
    # and under the hard VMEM cap.
    mblk = m_cands[0]
    for m in m_cands:
        if b_min * m * itemsize <= _TARGET_TILE_BYTES and fits_cap(b_min, m):
            mblk = m
    if not fits_cap(b_min, mblk):
        mblk = m_cands[0]    # degenerate shapes: fall back to smallest block

    # Largest batch block whose tile fits the target and the hard cap.
    bblk = b_min
    for b in b_cands:
        if b * mblk * itemsize <= _TARGET_TILE_BYTES and fits_cap(b, mblk):
            bblk = b
    return bblk, mblk


# --------------------------------------------------------------- wrapper ----

def position_embedding(x, pos_emb, *, min_pallas_bytes=_MIN_PALLAS_BYTES):
    """Forward of PositionEmbedding: x + pos_emb.

    x:       (B, N, D)
    pos_emb: (1, N, D)
    """
    B, N, D = x.shape
    assert pos_emb.shape == (1, N, D), pos_emb.shape

    pos_emb = pos_emb.astype(x.dtype)           # avoid promote-then-store
    itemsize = jnp.dtype(x.dtype).itemsize

    # Tiny inputs: launch overhead dominates and the custom call blocks fusion.
    if B * N * D * itemsize < min_pallas_bytes:
        return x + pos_emb

    # Lane-dense layout plumbing: flatten (N, D) -> M so the last (lane) dim
    # is large even when D < 128.
    M = N * D
    x2 = x.reshape(B, M)
    p2 = pos_emb.reshape(1, M)

    bblk, mblk = _pick_blocks(B, M, itemsize)
    # Batch axis INNERMOST: pos block index only depends on the outer axis, so
    # the parameter tile stays VMEM-resident across consecutive batch steps.
    grid = (M // mblk, B // bblk)

    tile_bytes = bblk * mblk * itemsize
    pos_bytes = mblk * itemsize
    # 2x double-buffered input + 2x double-buffered output + 2x pos tile + slack.
    vmem_budget = int(max(4 * tile_bytes + 2 * pos_bytes + (2 << 20), 16 << 20))

    x_spec = pl.BlockSpec((bblk, mblk), lambda m, b: (b, m))
    pos_spec = pl.BlockSpec((1, mblk), lambda m, b: (0, m))   # const in b

    out2 = pl.pallas_call(
        _pos_emb_kernel,
        out_shape=jax.ShapeDtypeStruct((B, M), x.dtype),
        grid=grid,
        in_specs=[x_spec, pos_spec],
        out_specs=x_spec,
        compiler_params=pltpu.CompilerParams(
            dimension_semantics=("parallel", "parallel"),
            vmem_limit_bytes=vmem_budget,
        ),
    )(x2, p2)

    return out2.reshape(B, N, D)


# ------------------------------------------------------------------ main ----

if __name__ == "__main__":
    key = jax.random.PRNGKey(0)

    # Shapes implied by the module: batch=2, input_seq=8, d_model=32.
    B, N, D = 2, 8, 32
    kx, kp, k2, k3 = jax.random.split(key, 4)
    x = jax.random.normal(kx, (B, N, D), dtype=jnp.float32)

    # Module init: position_embedding = zeros(1, input_seq, d_model).
    pos_zero = jnp.zeros((1, N, D), jnp.float32)
    out_zero = position_embedding(x, pos_zero)            # tiny -> jnp fallback
    jax.block_until_ready(out_zero)
    assert jnp.allclose(out_zero, x, atol=1e-6, rtol=1e-6)

    # Same small shape, but force the Pallas path (single-tile grid).
    pos_rand = jax.random.normal(kp, (1, N, D), dtype=jnp.float32)
    out_rand = position_embedding(x, pos_rand, min_pallas_bytes=0)
    jax.block_until_ready(out_rand)
    assert jnp.allclose(out_rand, x + pos_rand, atol=1e-6, rtol=1e-6)

    # Larger f32 shape exercising a multi-step grid over BOTH axes
    # (pos residency across the inner batch steps, re-fetch across seq steps).
    B2, N2, D2 = 16, 1024, 128
    kx2, kp2 = jax.random.split(k2)
    x2 = jax.random.normal(kx2, (B2, N2, D2), dtype=jnp.float32)
    pos2 = jax.random.normal(kp2, (1, N2, D2), dtype=jnp.float32)
    out2 = position_embedding(x2, pos2)
    jax.block_until_ready(out2)
    assert jnp.allclose(out2, x2 + pos2, atol=1e-6, rtol=1e-6)

    # bf16 path (dtype-aware sublane alignment) with small D (lane-dense reshape).
    B3, N3, D3 = 16, 512, 64
    kx3, kp3 = jax.random.split(k3)
    x3 = jax.random.normal(kx3, (B3, N3, D3), dtype=jnp.bfloat16)
    pos3 = jax.random.normal(kp3, (1, N3, D3), dtype=jnp.float32)  # mixed dtype
    out3 = position_embedding(x3, pos3)
    jax.block_until_ready(out3)
    ref3 = x3 + pos3.astype(jnp.bfloat16)
    assert jnp.allclose(out3.astype(jnp.float32), ref3.astype(jnp.float32),
                        atol=1e-2, rtol=1e-2)

    print("KERNEL_OK")
</pallas_src>

<mosaic_0001>
module attributes {stable_mosaic.version = 11 : i64} {
  func.func @_pos_emb_kernel(%arg0: i32, %arg1: i32, %arg2: memref<2x256xf32, #tpu.memory_space<vmem>>, %arg3: memref<1x256xf32, #tpu.memory_space<vmem>>, %arg4: memref<2x256xf32, #tpu.memory_space<vmem>>) attributes {dimension_semantics = [#tpu.dimension_semantics<parallel>, #tpu.dimension_semantics<parallel>], iteration_bounds = array<i64: 1, 1>, scalar_prefetch = 0 : i64, scratch_operands = 0 : i64, tpu.core_type = #tpu.core_type<tc>, window_params = [{transform_indices = @transform_0, window_bounds = array<i64: 2, 256>}, {transform_indices = @transform_1, window_bounds = array<i64: 1, 256>}, {transform_indices = @transform_2, window_bounds = array<i64: 2, 256>}]} {
    %c0 = arith.constant 0 : index
    %c0_0 = arith.constant 0 : index
    %0 = vector.load %arg2[%c0, %c0_0] : memref<2x256xf32, #tpu.memory_space<vmem>>, vector<2x256xf32>
    %c0_1 = arith.constant 0 : index
    %c0_2 = arith.constant 0 : index
    %1 = vector.load %arg3[%c0_1, %c0_2] : memref<1x256xf32, #tpu.memory_space<vmem>>, vector<1x256xf32>
    %2 = vector.broadcast %1 : vector<1x256xf32> to vector<2x256xf32>
    %3 = arith.addf %0, %2 : vector<2x256xf32>
    %c0_3 = arith.constant 0 : index
    %c0_4 = arith.constant 0 : index
    %4 = vector.load %arg4[%c0_3, %c0_4] : memref<2x256xf32, #tpu.memory_space<vmem>>, vector<2x256xf32>
    tpu.vector_store %arg4[%c0_3, %c0_4], %3 {strides = array<i32>} : memref<2x256xf32, #tpu.memory_space<vmem>>, vector<2x256xf32>,
    return
  }
  func.func @transform_0(%arg0: i32, %arg1: i32) -> (i32, i32) {
    %c0_i32 = arith.constant 0 : i32
    return %arg1, %arg0 : i32, i32
  }
  func.func @transform_1(%arg0: i32, %arg1: i32) -> (i32, i32) {
    %c0_i32 = arith.constant 0 : i32
    %c0_i32_0 = arith.constant 0 : i32
    return %c0_i32, %arg0 : i32, i32
  }
  func.func @transform_2(%arg0: i32, %arg1: i32) -> (i32, i32) {
    %c0_i32 = arith.constant 0 : i32
    return %arg1, %arg0 : i32, i32
  }
}

</mosaic_0001>

<llo_original>
// kernel: tpu_custom_call.1
$region0: #{tpu_custom_call.1}
  #allocation0 [shape = 'u32[]', space=smem, size = 0x4, offset = 0x4, fixed_abs, tag = 'smem constant byte address 0x4 - core index']
  #allocation1 [shape = 'u32[144,128]{1,0:T(1,128)}', space=vmem, size = 0x12000, scoped, tag = 'internal scratch']
  %s0 = inlined_call_operand.hbm [shape: f32[2,256], index: 0, kind: input, shape index: {}]
  %s1 = inlined_call_operand.vmem [shape: f32[1,256], index: 1, kind: input, shape index: {}]
  %s2 = inlined_call_operand.hbm [shape: f32[2,256], index: 2, kind: output, shape index: {}]
  %s3 = sld [smem:[#allocation0]]
  $region22: #{tpu_custom_call.1} parent=0
    _
  %s5 = ssub.s32 1, %s3
  %s6 = scalar_select 0, %s5, %s3
  $region1: #{tpu_custom_call.1} parent=0
    #allocation2 [shape = 'u8[2048]{0}', space=vmem, size = 0x800, scoped, tag = 'input window, operand 0, single buffered']
    #allocation3 [shape = 's32[1]{0}', space=sflag, size = 0x4, scoped, tag = 'scoped memory for tpu_custom_call.1']
    #allocation4 [shape = 's32[1]{0}', space=sflag, size = 0x4, scoped, tag = 'scoped memory for tpu_custom_call.1']
    #allocation5 [shape = 'u8[2048]{0}', space=vmem, size = 0x800, scoped, tag = 'output window, operand 0, single buffered']
    %7 = vsyncpa [#allocation3], 0
    %8 = vsyncpa [#allocation4], 0
    // Predicated region
    $region2: #{tpu_custom_call.1} parent=1 // pred_check
      _
    $region3: #{tpu_custom_call.1} parent=1 // pred_check_branch
      %10 = sbr.rel (0) target = $region5
    $region4: #{tpu_custom_call.1} parent=1 // pred_region
      %s12 = ssub.s32 64, 64
      %13 = vsyncadd [#allocation3], %s12
      %s15 = sshll.u32 [#allocation2], 4
      %s16 = int_to_ptr.vmem [resolvable:$true] %s15
      %18 = dma.hbm_to_vmem [thread:$0]  %s0, 64, %s16, [#allocation3]
    $region5: #{tpu_custom_call.1} parent=1 // pred_fallthru
      _
    // Predicated region
    $region6: #{tpu_custom_call.1} parent=1 // pred_check
      _
    $region7: #{tpu_custom_call.1} parent=1 // pred_check_branch
      %20 = sbr.rel (0) target = $region9
    $region8: #{tpu_custom_call.1} parent=1 // pred_region
      _
    $region9: #{tpu_custom_call.1} parent=1 // pred_fallthru
      _
    // Predicated region
    $region10: #{tpu_custom_call.1} parent=1 // pred_check
      _
    $region11: #{tpu_custom_call.1} parent=1 // pred_check_branch
      %22 = sbr.rel (0) target = $region13
    $region12: #{tpu_custom_call.1} parent=1 // pred_region
      %23 = dma.done [#allocation3], 64
    $region13: #{tpu_custom_call.1} parent=1 // pred_fallthru
      _
    %v24 = vld [vmem:[#allocation2] sm:$0xf]
    %v25 = vld [vmem:[%s1] sm:$0x3]
    %v27 = vlaneseq
    %v28 = vshrl.u32 %v27, 7
    %v29 = vsub.s32 0, %v28
    %v30 = vrot.slane %v25, %v29
    %v31 = vlaneseq
    %v32 = vshrl.u32 %v31, 7
    %v33 = vsub.s32 1, %v32
    %v34 = vrot.slane %v25, %v33
    %v35 = vcombine.low %v30, %v34
    %v37 = vunpack.c.l.s4 1983009808
    %v38 = vunpack.c.0.s8 %v37
    %v39 = vlaneseq
    %v40 = vshrl.u32 %v39, 7
    %v41 = vsub.s32 %v38, %v40
    %v42 = vrot.slane %v35, %v41
    %v44 = vadd.f32 %v24, %v42
    %45 = vst [vmem:[#allocation5] sm:$0xf] %v44
    // Predicated region
    $region14: #{tpu_custom_call.1} parent=1 // pred_check
      _
    $region15: #{tpu_custom_call.1} parent=1 // pred_check_branch
      %47 = sbr.rel (0) target = $region17
    $region16: #{tpu_custom_call.1} parent=1 // pred_region
      %s49 = ssub.s32 64, 64
      %50 = vsyncadd [#allocation4], %s49
      %s52 = sshll.u32 [#allocation5], 4
      %s53 = int_to_ptr.vmem [resolvable:$true] %s52
      %55 = dma.vmem_to_hbm [thread:$0]  %s53, 64, %s2, [#allocation4]
    $region17: #{tpu_custom_call.1} parent=1 // pred_fallthru
      _
    // Predicated region
    $region18: #{tpu_custom_call.1} parent=1 // pred_check
      _
    $region19: #{tpu_custom_call.1} parent=1 // pred_check_branch
      %57 = sbr.rel (0) target = $region21
    $region20: #{tpu_custom_call.1} parent=1 // pred_region
      %58 = dma.done [#allocation4], 64
    $region21: #{tpu_custom_call.1} parent=1 // pred_fallthru
      _
    %59 = vsyncpa [#allocation3], 1
    %60 = vsyncpa [#allocation4], 1

</llo_original>
